<compile_context>
chip_gen: v7x
topology: tpu7x:2x2x1
jax: 0.10.0
libtpu: 0.0.40
codegen_flags: <defaults>
</compile_context>

<pallas_src>
import functools

import jax
import jax.numpy as jnp
from jax.experimental import pallas as pl
from jax.experimental.pallas import tpu as pltpu


def _mlp_kernel(x_ref, w1_ref, b1_ref, w3_ref, b3_ref, w2_ref, b2_ref,
                o_ref, acc_ref):
    """One (token-tile, inter-tile) step of the fused SwiGLU MLP.

    x_ref : (tm, dim)       VMEM (native dtype)
    w1_ref: (dim, tn)       VMEM (W1^T column tile)
    b1_ref: (1, tn)         VMEM
    w3_ref: (dim, tn)       VMEM (W3^T column tile)
    b3_ref: (1, tn)         VMEM
    w2_ref: (tn, dim)       VMEM (W2^T row tile)
    b2_ref: (1, dim)        VMEM
    o_ref : (tm, dim)       VMEM
    acc_ref: (tm, dim) f32  VMEM scratch (persists across the inter_dim axis)
    """
    k = pl.program_id(1)

    # Initialize the accumulator with the output bias (added exactly once).
    @pl.when(k == 0)
    def _():
        acc_ref[...] = jnp.zeros_like(acc_ref) + b2_ref[...].astype(jnp.float32)

    x = x_ref[...]  # keep native dtype -> bf16 MXU path when inputs are bf16

    x1 = jnp.dot(x, w1_ref[...], preferred_element_type=jnp.float32)
    x1 = x1 + b1_ref[...].astype(jnp.float32)
    x3 = jnp.dot(x, w3_ref[...], preferred_element_type=jnp.float32)
    x3 = x3 + b3_ref[...].astype(jnp.float32)

    # SiLU gate in f32 (VPU + EUP).
    h = (x1 * jax.nn.sigmoid(x1)) * x3

    acc_ref[...] += jnp.dot(h.astype(w2_ref.dtype), w2_ref[...],
                            preferred_element_type=jnp.float32)

    @pl.when(k == pl.num_programs(1) - 1)
    def _():
        o_ref[...] = acc_ref[...].astype(o_ref.dtype)


def _round_up(a, b):
    return (a + b - 1) // b * b


def _pick_inter_tile(inter_dim, target):
    """Largest multiple of 128 that divides inter_dim and is <= target, else full."""
    if inter_dim <= target:
        return inter_dim
    t = (target // 128) * 128
    while t >= 128:
        if inter_dim % t == 0:
            return t
        t -= 128
    return inter_dim  # fall back to a single (untiled) reduction step


@functools.partial(jax.jit, static_argnames=("tm", "tn_inter"))
def mlp_pallas(x, w1, b1, w2, b2, w3, b3, *, tm=256, tn_inter=512):
    """x: (B, S, dim). Weights in PyTorch nn.Linear convention:
    w1, w3: (inter_dim, dim); w2: (dim, inter_dim); biases 1-D.

    tn_inter=512 is a safe default on v7x (64 MiB VMEM); larger (1024-2048) can be
    used on v5e/v6e (128 MiB) when dim is large.
    """
    B, S, dim = x.shape
    inter_dim = w1.shape[0]
    M = B * S

    # Token tile: fill the MXU, but never exceed the (8-aligned) token count.
    tm_eff = min(tm, _round_up(M, 8))
    M_pad = _round_up(M, tm_eff)

    tn = _pick_inter_tile(inter_dim, tn_inter)

    x2d = x.reshape(M, dim)
    if M_pad != M:
        x2d = jnp.pad(x2d, ((0, M_pad - M), (0, 0)))

    # Pre-transpose weights to (in, out); biases as (1, N) rows for lane broadcast.
    # TODO(synk): for real deployments, pre-transpose weights once outside the
    # forward instead of per call.
    w1t = w1.T                     # (dim, inter_dim)
    w3t = w3.T                     # (dim, inter_dim)
    w2t = w2.T                     # (inter_dim, dim)
    b1r = b1.reshape(1, inter_dim)
    b3r = b3.reshape(1, inter_dim)
    b2r = b2.reshape(1, dim)

    grid = (M_pad // tm_eff, inter_dim // tn)

    itemsize_x = x.dtype.itemsize
    itemsize_w = w1.dtype.itemsize
    # VMEM plan: double-buffered x/out/weight tiles + f32 accumulator + intermediates.
    vmem_bytes = (
        2 * tm_eff * dim * itemsize_x                  # x tiles
        + 2 * tm_eff * dim * itemsize_x                # out tiles
        + 2 * (2 * dim * tn + tn * dim) * itemsize_w   # w1/w3/w2 tiles (double-buffered)
        + 2 * (2 * tn + dim) * itemsize_w              # bias tiles
        + tm_eff * dim * 4                             # f32 accumulator scratch
        + 3 * tm_eff * tn * 4                          # x1/x3/h f32 intermediates
    )
    vmem_limit = int(min(int(vmem_bytes * 1.25) + (2 << 20), 100 << 20))

    cost = pl.CostEstimate(
        flops=6 * M_pad * dim * inter_dim,
        transcendentals=M_pad * inter_dim,
        bytes_accessed=(
            2 * M_pad * dim * itemsize_x                       # x in + out
            + 3 * dim * inter_dim * itemsize_w                 # three weight matrices
            + (2 * inter_dim + dim) * itemsize_w               # biases
        ),
    )

    out2d = pl.pallas_call(
        _mlp_kernel,
        out_shape=jax.ShapeDtypeStruct((M_pad, dim), x.dtype),
        grid_spec=pltpu.PrefetchScalarGridSpec(
            num_scalar_prefetch=0,
            grid=grid,
            in_specs=[
                pl.BlockSpec((tm_eff, dim), lambda i, k: (i, 0)),   # x tile
                pl.BlockSpec((dim, tn), lambda i, k: (0, k)),       # W1^T column tile
                pl.BlockSpec((1, tn), lambda i, k: (0, k)),         # b1 tile
                pl.BlockSpec((dim, tn), lambda i, k: (0, k)),       # W3^T column tile
                pl.BlockSpec((1, tn), lambda i, k: (0, k)),         # b3 tile
                pl.BlockSpec((tn, dim), lambda i, k: (k, 0)),       # W2^T row tile
                pl.BlockSpec((1, dim), lambda i, k: (0, 0)),        # b2 (constant)
            ],
            out_specs=pl.BlockSpec((tm_eff, dim), lambda i, k: (i, 0)),
            scratch_shapes=[pltpu.VMEM((tm_eff, dim), jnp.float32)],
        ),
        compiler_params=pltpu.CompilerParams(
            dimension_semantics=("parallel", "arbitrary"),
            vmem_limit_bytes=vmem_limit,
        ),
        cost_estimate=cost,
    )(x2d, w1t, b1r, w3t, b3r, w2t, b2r)

    if M_pad != M:
        out2d = out2d[:M]
    return out2d.reshape(B, S, dim)


def init_linear_params(key, in_features, out_features, dtype=jnp.float32):
    """Deterministic init mirroring nn.Linear's kaiming-uniform + uniform bias."""
    kw, kb = jax.random.split(key)
    bound_w = 1.0 / (in_features ** 0.5) * (3.0 ** 0.5)
    w = jax.random.uniform(kw, (out_features, in_features), dtype,
                           minval=-bound_w, maxval=bound_w)
    bound_b = 1.0 / (in_features ** 0.5)
    b = jax.random.uniform(kb, (out_features,), dtype,
                           minval=-bound_b, maxval=bound_b)
    return w, b


def mlp_reference(x, w1, b1, w2, b2, w3, b3):
    """Pure-JAX reference of the PyTorch forward."""
    x1 = x @ w1.T + b1
    x3 = x @ w3.T + b3
    h = jax.nn.silu(x1) * x3
    return h @ w2.T + b2


if __name__ == "__main__":
    # Small shapes consistent with the module's forward.
    B, S = 2, 8
    dim, inter_dim = 32, 64

    key = jax.random.PRNGKey(0)
    kx, k1, k2, k3 = jax.random.split(key, 4)

    x = jax.random.normal(kx, (B, S, dim), jnp.float32)
    w1, b1 = init_linear_params(k1, dim, inter_dim)      # w1: (inter_dim, dim)
    w2, b2 = init_linear_params(k2, inter_dim, dim)      # w2: (dim, inter_dim)
    w3, b3 = init_linear_params(k3, dim, inter_dim)      # w3: (inter_dim, dim)

    out = mlp_pallas(x, w1, b1, w2, b2, w3, b3)
    out = jax.block_until_ready(out)

    ref = mlp_reference(x, w1, b1, w2, b2, w3, b3)
    assert out.shape == (B, S, dim)
    assert jnp.allclose(out, ref, atol=1e-5, rtol=1e-5), (
        f"max abs err = {jnp.max(jnp.abs(out - ref))}"
    )

    print("KERNEL_OK")
</pallas_src>

<mosaic_0001>
module attributes {stable_mosaic.version = 11 : i64} {
  func.func @_mlp_kernel(%arg0: i32, %arg1: i32, %arg2: memref<16x32xf32, #tpu.memory_space<vmem>>, %arg3: memref<32x64xf32, #tpu.memory_space<vmem>>, %arg4: memref<1x64xf32, #tpu.memory_space<vmem>>, %arg5: memref<32x64xf32, #tpu.memory_space<vmem>>, %arg6: memref<1x64xf32, #tpu.memory_space<vmem>>, %arg7: memref<64x32xf32, #tpu.memory_space<vmem>>, %arg8: memref<1x32xf32, #tpu.memory_space<vmem>>, %arg9: memref<16x32xf32, #tpu.memory_space<vmem>>, %arg10: memref<16x32xf32, #tpu.memory_space<vmem>>) attributes {dimension_semantics = [#tpu.dimension_semantics<parallel>, #tpu.dimension_semantics<arbitrary>], iteration_bounds = array<i64: 1, 1>, scalar_prefetch = 0 : i64, scratch_operands = 1 : i64, tpu.core_type = #tpu.core_type<tc>, window_params = [{transform_indices = @transform_0, window_bounds = array<i64: 16, 32>}, {transform_indices = @transform_1, window_bounds = array<i64: 32, 64>}, {transform_indices = @transform_2, window_bounds = array<i64: 1, 64>}, {transform_indices = @transform_3, window_bounds = array<i64: 32, 64>}, {transform_indices = @transform_4, window_bounds = array<i64: 1, 64>}, {transform_indices = @transform_5, window_bounds = array<i64: 64, 32>}, {pipeline_mode = #tpu.pipeline_mode<synchronous>, transform_indices = @transform_6, window_bounds = array<i64: 1, 32>}, {transform_indices = @transform_7, window_bounds = array<i64: 16, 32>}]} {
    %c0_i32 = arith.constant 0 : i32
    %0 = arith.cmpi eq, %arg1, %c0_i32 : i32
    %1 = arith.extui %0 : i1 to i32
    %c0_i32_0 = arith.constant 0 : i32
    %2 = arith.cmpi ne, %1, %c0_i32_0 : i32
    scf.if %2 {
      %cst_21 = arith.constant 0.000000e+00 : f32
      %29 = vector.broadcast %cst_21 : f32 to vector<16x32xf32>
      %c0_22 = arith.constant 0 : index
      %c0_23 = arith.constant 0 : index
      %30 = vector.load %arg8[%c0_22, %c0_23] : memref<1x32xf32, #tpu.memory_space<vmem>>, vector<1x32xf32>
      %31 = vector.broadcast %30 : vector<1x32xf32> to vector<16x32xf32>
      %32 = arith.addf %29, %31 : vector<16x32xf32>
      %c0_24 = arith.constant 0 : index
      %c0_25 = arith.constant 0 : index
      %33 = vector.load %arg10[%c0_24, %c0_25] : memref<16x32xf32, #tpu.memory_space<vmem>>, vector<16x32xf32>
      tpu.vector_store %arg10[%c0_24, %c0_25], %32 {strides = array<i32>} : memref<16x32xf32, #tpu.memory_space<vmem>>, vector<16x32xf32>,
    } else {
    }
    %c0 = arith.constant 0 : index
    %c0_1 = arith.constant 0 : index
    %3 = vector.load %arg2[%c0, %c0_1] : memref<16x32xf32, #tpu.memory_space<vmem>>, vector<16x32xf32>
    %c0_2 = arith.constant 0 : index
    %c0_3 = arith.constant 0 : index
    %4 = vector.load %arg3[%c0_2, %c0_3] : memref<32x64xf32, #tpu.memory_space<vmem>>, vector<32x64xf32>
    %cst = arith.constant dense<0.000000e+00> : vector<16x64xf32>
    %5 = tpu.matmul %3, %4, %cst {dimension_numbers = #tpu.dot_dimension_numbers<[1], [0], [0], [1], [0, 0, 1, 1], [], []>} : vector<16x32xf32>, vector<32x64xf32>, vector<16x64xf32> -> vector<16x64xf32>
    %c0_4 = arith.constant 0 : index
    %c0_5 = arith.constant 0 : index
    %6 = vector.load %arg4[%c0_4, %c0_5] : memref<1x64xf32, #tpu.memory_space<vmem>>, vector<1x64xf32>
    %7 = vector.broadcast %6 : vector<1x64xf32> to vector<16x64xf32>
    %8 = arith.addf %5, %7 : vector<16x64xf32>
    %c0_6 = arith.constant 0 : index
    %c0_7 = arith.constant 0 : index
    %9 = vector.load %arg5[%c0_6, %c0_7] : memref<32x64xf32, #tpu.memory_space<vmem>>, vector<32x64xf32>
    %cst_8 = arith.constant dense<0.000000e+00> : vector<16x64xf32>
    %10 = tpu.matmul %3, %9, %cst_8 {dimension_numbers = #tpu.dot_dimension_numbers<[1], [0], [0], [1], [0, 0, 1, 1], [], []>} : vector<16x32xf32>, vector<32x64xf32>, vector<16x64xf32> -> vector<16x64xf32>
    %c0_9 = arith.constant 0 : index
    %c0_10 = arith.constant 0 : index
    %11 = vector.load %arg6[%c0_9, %c0_10] : memref<1x64xf32, #tpu.memory_space<vmem>>, vector<1x64xf32>
    %12 = vector.broadcast %11 : vector<1x64xf32> to vector<16x64xf32>
    %13 = arith.addf %10, %12 : vector<16x64xf32>
    %14 = arith.negf %8 : vector<16x64xf32>
    %15 = math.exp %14 : vector<16x64xf32>
    %cst_11 = arith.constant 1.000000e+00 : f32
    %16 = vector.broadcast %cst_11 : f32 to vector<16x64xf32>
    %17 = arith.addf %16, %15 : vector<16x64xf32>
    %18 = arith.divf %16, %17 : vector<16x64xf32>
    %19 = arith.mulf %8, %18 : vector<16x64xf32>
    %20 = arith.mulf %19, %13 : vector<16x64xf32>
    %c0_12 = arith.constant 0 : index
    %c0_13 = arith.constant 0 : index
    %21 = vector.load %arg10[%c0_12, %c0_13] : memref<16x32xf32, #tpu.memory_space<vmem>>, vector<16x32xf32>
    %c0_14 = arith.constant 0 : index
    %c0_15 = arith.constant 0 : index
    %22 = vector.load %arg7[%c0_14, %c0_15] : memref<64x32xf32, #tpu.memory_space<vmem>>, vector<64x32xf32>
    %cst_16 = arith.constant dense<0.000000e+00> : vector<16x32xf32>
    %23 = tpu.matmul %20, %22, %cst_16 {dimension_numbers = #tpu.dot_dimension_numbers<[1], [0], [0], [1], [0, 0, 1, 1], [], []>} : vector<16x64xf32>, vector<64x32xf32>, vector<16x32xf32> -> vector<16x32xf32>
    %24 = arith.addf %21, %23 : vector<16x32xf32>
    %c0_17 = arith.constant 0 : index
    %c0_18 = arith.constant 0 : index
    %25 = vector.load %arg10[%c0_17, %c0_18] : memref<16x32xf32, #tpu.memory_space<vmem>>, vector<16x32xf32>
    tpu.vector_store %arg10[%c0_17, %c0_18], %24 {strides = array<i32>} : memref<16x32xf32, #tpu.memory_space<vmem>>, vector<16x32xf32>,
    %c0_i32_19 = arith.constant 0 : i32
    %26 = arith.cmpi eq, %arg1, %c0_i32_19 : i32
    %27 = arith.extui %26 : i1 to i32
    %c0_i32_20 = arith.constant 0 : i32
    %28 = arith.cmpi ne, %27, %c0_i32_20 : i32
    scf.if %28 {
      %c0_21 = arith.constant 0 : index
      %c0_22 = arith.constant 0 : index
      %29 = vector.load %arg10[%c0_21, %c0_22] : memref<16x32xf32, #tpu.memory_space<vmem>>, vector<16x32xf32>
      %c0_23 = arith.constant 0 : index
      %c0_24 = arith.constant 0 : index
      %30 = vector.load %arg9[%c0_23, %c0_24] : memref<16x32xf32, #tpu.memory_space<vmem>>, vector<16x32xf32>
      tpu.vector_store %arg9[%c0_23, %c0_24], %29 {strides = array<i32>} : memref<16x32xf32, #tpu.memory_space<vmem>>, vector<16x32xf32>,
    } else {
    }
    return
  }
  func.func @transform_0(%arg0: i32, %arg1: i32) -> (i32, i32) {
    %c0_i32 = arith.constant 0 : i32
    %c0_i32_0 = arith.constant 0 : i32
    return %arg0, %c0_i32 : i32, i32
  }
  func.func @transform_1(%arg0: i32, %arg1: i32) -> (i32, i32) {
    %c0_i32 = arith.constant 0 : i32
    %c0_i32_0 = arith.constant 0 : i32
    return %c0_i32, %arg1 : i32, i32
  }
  func.func @transform_2(%arg0: i32, %arg1: i32) -> (i32, i32) {
    %c0_i32 = arith.constant 0 : i32
    %c0_i32_0 = arith.constant 0 : i32
    return %c0_i32, %arg1 : i32, i32
  }
  func.func @transform_3(%arg0: i32, %arg1: i32) -> (i32, i32) {
    %c0_i32 = arith.constant 0 : i32
    %c0_i32_0 = arith.constant 0 : i32
    return %c0_i32, %arg1 : i32, i32
  }
  func.func @transform_4(%arg0: i32, %arg1: i32) -> (i32, i32) {
    %c0_i32 = arith.constant 0 : i32
    %c0_i32_0 = arith.constant 0 : i32
    return %c0_i32, %arg1 : i32, i32
  }
  func.func @transform_5(%arg0: i32, %arg1: i32) -> (i32, i32) {
    %c0_i32 = arith.constant 0 : i32
    %c0_i32_0 = arith.constant 0 : i32
    return %arg1, %c0_i32 : i32, i32
  }
  func.func @transform_6(%arg0: i32, %arg1: i32) -> (i32, i32) {
    %c0_i32 = arith.constant 0 : i32
    %c0_i32_0 = arith.constant 0 : i32
    %c0_i32_1 = arith.constant 0 : i32
    return %c0_i32, %c0_i32_0 : i32, i32
  }
  func.func @transform_7(%arg0: i32, %arg1: i32) -> (i32, i32) {
    %c0_i32 = arith.constant 0 : i32
    %c0_i32_0 = arith.constant 0 : i32
    return %arg0, %c0_i32 : i32, i32
  }
}

</mosaic_0001>

<llo_original>
// kernel: mlp_pallas.1
$region0: #{mlp_pallas.1}
  #allocation0 [shape = 'u32[]', space=smem, size = 0x4, offset = 0x4, fixed_abs, tag = 'smem constant byte address 0x4 - core index']
  #allocation1 [shape = 'u32[144,128]{1,0:T(1,128)}', space=vmem, size = 0x12000, scoped, tag = 'internal scratch']
  #allocation2 [shape = 'f32[16,32]{1,0:T(8,128)}', space=vmem, size = 0x2000, scoped, tag = 'scratch operand']
  %s0 = inlined_call_operand.vmem [shape: f32[16,32], index: 0, kind: input, shape index: {}]
  %s1 = inlined_call_operand.vmem [shape: f32[32,64], index: 1, kind: input, shape index: {}]
  %s2 = inlined_call_operand.vmem [shape: f32[1,64], index: 2, kind: input, shape index: {}]
  %s3 = inlined_call_operand.vmem [shape: f32[32,64], index: 3, kind: input, shape index: {}]
  %s4 = inlined_call_operand.vmem [shape: f32[1,64], index: 4, kind: input, shape index: {}]
  %s5 = inlined_call_operand.vmem [shape: f32[64,32], index: 5, kind: input, shape index: {}]
  %s6 = inlined_call_operand.vmem [shape: f32[1,32], index: 6, kind: input, shape index: {}]
  %s7 = inlined_call_operand.hbm [shape: f32[16,32], index: 7, kind: output, shape index: {}]
  %s8 = sld [smem:[#allocation0]]
  $region46: #{mlp_pallas.1} parent=0
    _
  %s10 = ssub.s32 1, %s8
  %s11 = scalar_select 0, %s10, %s8
  $region1: #{mlp_pallas.1} parent=0
    #allocation3 [shape = 'u8[8192]{0}', space=vmem, size = 0x2000, scoped, tag = 'output window, operand 0, single buffered']
    #allocation4 [shape = 's32[1]{0}', space=sflag, size = 0x4, scoped, tag = 'scoped memory for mlp_pallas.1']
    %12 = vsyncpa [#allocation4], 0
    // Predicated region
    $region2: #{mlp_pallas.1} parent=1 // pred_check
      _
    $region3: #{mlp_pallas.1} parent=1 // pred_check_branch
      %14 = sbr.rel (0) target = $region5
    $region4: #{mlp_pallas.1} parent=1 // pred_region
      _
    $region5: #{mlp_pallas.1} parent=1 // pred_fallthru
      _
    // Predicated region
    $region6: #{mlp_pallas.1} parent=1 // pred_check
      _
    $region7: #{mlp_pallas.1} parent=1 // pred_check_branch
      %16 = sbr.rel (0) target = $region9
    $region8: #{mlp_pallas.1} parent=1 // pred_region
      _
    $region9: #{mlp_pallas.1} parent=1 // pred_fallthru
      _
    // Predicated region
    $region10: #{mlp_pallas.1} parent=1 // pred_check
      _
    $region11: #{mlp_pallas.1} parent=1 // pred_check_branch
      %18 = sbr.rel (0) target = $region13
    $region12: #{mlp_pallas.1} parent=1 // pred_region
      _
    $region13: #{mlp_pallas.1} parent=1 // pred_fallthru
      _
    // Predicated region
    $region14: #{mlp_pallas.1} parent=1 // pred_check
      _
    $region15: #{mlp_pallas.1} parent=1 // pred_check_branch
      %20 = sbr.rel (0) target = $region17
    $region16: #{mlp_pallas.1} parent=1 // pred_region
      _
    $region17: #{mlp_pallas.1} parent=1 // pred_fallthru
      _
    // Predicated region
    $region18: #{mlp_pallas.1} parent=1 // pred_check
      _
    $region19: #{mlp_pallas.1} parent=1 // pred_check_branch
      %22 = sbr.rel (0) target = $region21
    $region20: #{mlp_pallas.1} parent=1 // pred_region
      _
    $region21: #{mlp_pallas.1} parent=1 // pred_fallthru
      _
    // Predicated region
    $region22: #{mlp_pallas.1} parent=1 // pred_check
      _
    $region23: #{mlp_pallas.1} parent=1 // pred_check_branch
      %24 = sbr.rel (0) target = $region25
    $region24: #{mlp_pallas.1} parent=1 // pred_region
      _
    $region25: #{mlp_pallas.1} parent=1 // pred_fallthru
      _
    // Predicated region
    $region26: #{mlp_pallas.1} parent=1 // pred_check
      _
    $region27: #{mlp_pallas.1} parent=1 // pred_check_branch
      %26 = sbr.rel (0) target = $region29
    $region28: #{mlp_pallas.1} parent=1 // pred_region
      _
    $region29: #{mlp_pallas.1} parent=1 // pred_fallthru
      _
    %p27 = scmp.eq.s32.totalorder 0, 0
    // Predicated region
    $region30: #{mlp_pallas.1} parent=1 // pred_check
      %p28 = pneg %p27
    $region31: #{mlp_pallas.1} parent=1 // pred_check_branch
      %30 = sbr.rel (%p28) target = $region33
    $region32: #{mlp_pallas.1} parent=1 // pred_region
      %v31 = vld [vmem:[%s6] sm:$0x1]
      %v33 = vlaneseq
      %v34 = vshrl.u32 %v33, 7
      %v35 = vsub.s32 0, %v34
      %v36 = vrot.slane %v31, %v35
      %v38 = vadd.f32 %v36, 0.0
      %vm39 = vcmask 261120
      %40 = vst.msk [vmem:[#allocation2] sm:$0xff] %vm39, %v38
      %41 = vst.msk [vmem:[#allocation2 + $0x8] sm:$0xff] %vm39, %v38
    $region33: #{mlp_pallas.1} parent=1 // pred_fallthru
      _
    %v42 = vld [vmem:[%s0] sm:$0xff]
    %v43 = vld [vmem:[%s0 + $0x8] sm:$0xff]
    %v44 = vld [vmem:[%s1] sm:$0xff]
    %v45 = vld [vmem:[%s1 + $0x8] sm:$0xff]
    %v46 = vld [vmem:[%s1 + $0x10] sm:$0xff]
    %v47 = vld [vmem:[%s1 + $0x18] sm:$0xff]
    %v48 = vld [vmem:[%s2] sm:$0x1]
    %v50 = vlaneseq
    %v51 = vshrl.u32 %v50, 7
    %v52 = vsub.s32 0, %v51
    %v53 = vrot.slane %v48, %v52
    %vm55 = vcmask 261120
    %v57 = vsel %vm55, %v42, 0
    %v60 = vsel %vm55, %v43, 0
    %62 = vmatprep.subr.mxu0 0.0
    %63 = vmatpush1.msra.mxu0 %v44
    %64 = vmatprep.subr.mxu0 0.0
    %65 = vmatpush1.msra.mxu0 %v45
    %66 = vmatprep.subr.mxu0 0.0
    %67 = vmatpush1.msra.mxu0 %v46
    %68 = vmatprep.subr.mxu0 0.0
    %69 = vmatpush1.msra.mxu0 %v47
    %70 = vmatprep.subr.mxu0 0.0
    %71 = vmatpush1.msra.mxu0 0.0
    %72 = vmatprep.subr.mxu0 0.0
    %73 = vmatpush1.msra.mxu0 0.0
    %74 = vmatprep.subr.mxu0 0.0
    %75 = vmatpush1.msra.mxu0 0.0
    %76 = vmatprep.subr.mxu0 0.0
    %77 = vmatpush1.msra.mxu0 0.0
    %78 = vmatprep.subr.mxu0 0.0
    %79 = vmatpush1.msra.mxu0 0.0
    %80 = vmatprep.subr.mxu0 0.0
    %81 = vmatpush1.msra.mxu0 0.0
    %82 = vmatprep.subr.mxu0 0.0
    %83 = vmatpush1.msra.mxu0 0.0
    %84 = vmatprep.subr.mxu0 0.0
    %85 = vmatpush1.msra.mxu0 0.0
    %86 = vmatprep.subr.mxu0 0.0
    %87 = vmatpush1.msra.mxu0 0.0
    %88 = vmatprep.subr.mxu0 0.0
    %89 = vmatpush1.msra.mxu0 0.0
    %90 = vmatprep.subr.mxu0 0.0
    %91 = vmatpush1.msra.mxu0 0.0
    %92 = vmatprep.subr.mxu0 0.0
    %93 = vmatpush1.msra.mxu0 0.0
    %94 = vmatprep.subr.mxu0 0.0
    %95 = vmatpush1.msra.mxu0 0.0
    %96 = vmatprep.subr.mxu0 0.0
    %97 = vmatpush1.msra.mxu0 0.0
    %98 = vmatprep.subr.mxu0 0.0
    %99 = vmatpush1.msra.mxu0 0.0
    %100 = vmatprep.subr.mxu0 0.0
    %101 = vmatpush1.msra.mxu0 0.0
    %102 = vmatprep.subr.mxu0 0.0
    %103 = vmatpush1.msra.mxu0 0.0
    %104 = vmatprep.subr.mxu0 0.0
    %105 = vmatpush1.msra.mxu0 0.0
    %106 = vmatprep.subr.mxu0 0.0
    %107 = vmatpush1.msra.mxu0 0.0
    %108 = vmatprep.subr.mxu0 0.0
    %109 = vmatpush1.msra.mxu0 0.0
    %110 = vmatprep.subr.mxu0 0.0
    %111 = vmatpush1.msra.mxu0 0.0
    %112 = vmatprep.subr.mxu0 0.0
    %113 = vmatpush1.msra.mxu0 0.0
    %114 = vmatprep.subr.mxu0 0.0
    %115 = vmatpush1.msra.mxu0 0.0
    %116 = vmatprep.subr.mxu0 0.0
    %117 = vmatpush1.msra.mxu0 0.0
    %118 = vmatprep.subr.mxu0 0.0
    %119 = vmatpush1.msra.mxu0 0.0
    %120 = vmatprep.subr.mxu0 0.0
    %121 = vmatpush1.msra.mxu0 0.0
    %122 = vmatprep.subr.mxu0 0.0
    %123 = vmatpush1.msra.mxu0 0.0
    %124 = vmatprep.subr.mxu0 0.0
    %125 = vmatpush1.msra.mxu0 0.0
    %126 = vmatprep.mubr.f32.mxu0 0.0
    %127 = vmatmul.mubr.f32.gmra.mrb[0].mxu0 %v57
    %v128 = vpop.f32.mrb[0].mxu0
    %v129 = vadd.f32 %v53, %v128
    %v130 = vpop.f32.mrb[0].mxu0
    %131 = vmatprep.mubr.f32.mxu0 0.0
    %132 = vmatmul.mubr.f32.gmra.mrb[0].mxu0 %v60
    %v133 = vpop.f32.mrb[0].mxu0
    %v134 = vadd.f32 %v53, %v133
    %v135 = vpop.f32.mrb[0].mxu0
    %136 = vdwg.mxu0
    %v137 = vld [vmem:[%s3] sm:$0xff]
    %v138 = vld [vmem:[%s3 + $0x8] sm:$0xff]
    %v139 = vld [vmem:[%s3 + $0x10] sm:$0xff]
    %v140 = vld [vmem:[%s3 + $0x18] sm:$0xff]
    %v141 = vld [vmem:[%s4] sm:$0x1]
    %v143 = vlaneseq
    %v144 = vshrl.u32 %v143, 7
    %v145 = vsub.s32 0, %v144
    %v146 = vrot.slane %v141, %v145
    %148 = vmatprep.subr.mxu0 0.0
    %149 = vmatpush1.msra.mxu0 %v137
    %150 = vmatprep.subr.mxu0 0.0
    %151 = vmatpush1.msra.mxu0 %v138
    %152 = vmatprep.subr.mxu0 0.0
    %153 = vmatpush1.msra.mxu0 %v139
    %154 = vmatprep.subr.mxu0 0.0
    %155 = vmatpush1.msra.mxu0 %v140
    %156 = vmatprep.subr.mxu0 0.0
    %157 = vmatpush1.msra.mxu0 0.0
    %158 = vmatprep.subr.mxu0 0.0
    %159 = vmatpush1.msra.mxu0 0.0
    %160 = vmatprep.subr.mxu0 0.0
    %161 = vmatpush1.msra.mxu0 0.0
    %162 = vmatprep.subr.mxu0 0.0
    %163 = vmatpush1.msra.mxu0 0.0
    %164 = vmatprep.subr.mxu0 0.0
    %165 = vmatpush1.msra.mxu0 0.0
    %166 = vmatprep.subr.mxu0 0.0
    %167 = vmatpush1.msra.mxu0 0.0
    %168 = vmatprep.subr.mxu0 0.0
    %169 = vmatpush1.msra.mxu0 0.0
    %170 = vmatprep.subr.mxu0 0.0
    %171 = vmatpush1.msra.mxu0 0.0
    %172 = vmatprep.subr.mxu0 0.0
    %173 = vmatpush1.msra.mxu0 0.0
    %174 = vmatprep.subr.mxu0 0.0
    %175 = vmatpush1.msra.mxu0 0.0
    %176 = vmatprep.subr.mxu0 0.0
    %177 = vmatpush1.msra.mxu0 0.0
    %178 = vmatprep.subr.mxu0 0.0
    %179 = vmatpush1.msra.mxu0 0.0
    %180 = vmatprep.subr.mxu0 0.0
    %181 = vmatpush1.msra.mxu0 0.0
    %182 = vmatprep.subr.mxu0 0.0
    %183 = vmatpush1.msra.mxu0 0.0
    %184 = vmatprep.subr.mxu0 0.0
    %185 = vmatpush1.msra.mxu0 0.0
    %186 = vmatprep.subr.mxu0 0.0
    %187 = vmatpush1.msra.mxu0 0.0
    %188 = vmatprep.subr.mxu0 0.0
    %189 = vmatpush1.msra.mxu0 0.0
    %190 = vmatprep.subr.mxu0 0.0
    %191 = vmatpush1.msra.mxu0 0.0
    %192 = vmatprep.subr.mxu0 0.0
    %193 = vmatpush1.msra.mxu0 0.0
    %194 = vmatprep.subr.mxu0 0.0
    %195 = vmatpush1.msra.mxu0 0.0
    %196 = vmatprep.subr.mxu0 0.0
    %197 = vmatpush1.msra.mxu0 0.0
    %198 = vmatprep.subr.mxu0 0.0
    %199 = vmatpush1.msra.mxu0 0.0
    %200 = vmatprep.subr.mxu0 0.0
    %201 = vmatpush1.msra.mxu0 0.0
    %202 = vmatprep.subr.mxu0 0.0
    %203 = vmatpush1.msra.mxu0 0.0
    %204 = vmatprep.subr.mxu0 0.0
    %205 = vmatpush1.msra.mxu0 0.0
    %206 = vmatprep.subr.mxu0 0.0
    %207 = vmatpush1.msra.mxu0 0.0
    %208 = vmatprep.subr.mxu0 0.0
    %209 = vmatpush1.msra.mxu0 0.0
    %210 = vmatprep.subr.mxu0 0.0
    %211 = vmatpush1.msra.mxu0 0.0
    %212 = vmatprep.mubr.f32.mxu0 0.0
    %213 = vmatmul.mubr.f32.gmra.mrb[0].mxu0 %v57
    %v214 = vpop.f32.mrb[0].mxu0
    %v215 = vadd.f32 %v146, %v214
    %v216 = vpop.f32.mrb[0].mxu0
    %217 = vmatprep.mubr.f32.mxu0 0.0
    %218 = vmatmul.mubr.f32.gmra.mrb[0].mxu0 %v60
    %v219 = vpop.f32.mrb[0].mxu0
    %v220 = vadd.f32 %v146, %v219
    %v221 = vpop.f32.mrb[0].mxu0
    %222 = vdwg.mxu0
    %v223 = vxor.u32 %v129, 2147483648
    %v224 = vxor.u32 %v134, 2147483648
    %v225 = vmul.f32 %v223, 1.442695
    %v226 = vpow.pop %v225
    %v227 = vmul.f32 %v224, 1.442695
    %v228 = vpow.pop %v227
    %v229 = vadd.f32 %v226, 1.0
    %v230 = vadd.f32 %v228, 1.0
    %v231 = vrcp.pop %v229
    %v232 = vmul.f32 1.0, %v231
    %v233 = vrcp.pop %v230
    %v234 = vmul.f32 1.0, %v233
    %v235 = vmul.f32 %v129, %v232
    %v236 = vmul.f32 %v134, %v234
    %v237 = vmul.f32 %v235, %v215
    %v238 = vmul.f32 %v236, %v220
    %v239 = vld [vmem:[#allocation2] sm:$0xff]
    %v240 = vld [vmem:[#allocation2 + $0x8] sm:$0xff]
    %v241 = vld [vmem:[%s5] sm:$0xff]
    %v242 = vld [vmem:[%s5 + $0x8] sm:$0xff]
    %v243 = vld [vmem:[%s5 + $0x10] sm:$0xff]
    %v244 = vld [vmem:[%s5 + $0x18] sm:$0xff]
    %v245 = vld [vmem:[%s5 + $0x20] sm:$0xff]
    %v246 = vld [vmem:[%s5 + $0x28] sm:$0xff]
    %v247 = vld [vmem:[%s5 + $0x30] sm:$0xff]
    %v248 = vld [vmem:[%s5 + $0x38] sm:$0xff]
    %vm249 = vcmask 523264
    %v251 = vsel %vm249, %v237, 0
    %v254 = vsel %vm249, %v238, 0
    %256 = vmatprep.subr.mxu0 0.0
    %257 = vmatpush1.msra.mxu0 %v241
    %258 = vmatprep.subr.mxu0 0.0
    %259 = vmatpush1.msra.mxu0 %v242
    %260 = vmatprep.subr.mxu0 0.0
    %261 = vmatpush1.msra.mxu0 %v243
    %262 = vmatprep.subr.mxu0 0.0
    %263 = vmatpush1.msra.mxu0 %v244
    %264 = vmatprep.subr.mxu0 0.0
    %265 = vmatpush1.msra.mxu0 %v245
    %266 = vmatprep.subr.mxu0 0.0
    %267 = vmatpush1.msra.mxu0 %v246
    %268 = vmatprep.subr.mxu0 0.0
    %269 = vmatpush1.msra.mxu0 %v247
    %270 = vmatprep.subr.mxu0 0.0
    %271 = vmatpush1.msra.mxu0 %v248
    %272 = vmatprep.subr.mxu0 0.0
    %273 = vmatpush1.msra.mxu0 0.0
    %274 = vmatprep.subr.mxu0 0.0
    %275 = vmatpush1.msra.mxu0 0.0
    %276 = vmatprep.subr.mxu0 0.0
    %277 = vmatpush1.msra.mxu0 0.0
    %278 = vmatprep.subr.mxu0 0.0
    %279 = vmatpush1.msra.mxu0 0.0
    %280 = vmatprep.subr.mxu0 0.0
    %281 = vmatpush1.msra.mxu0 0.0
    %282 = vmatprep.subr.mxu0 0.0
    %283 = vmatpush1.msra.mxu0 0.0
    %284 = vmatprep.subr.mxu0 0.0
    %285 = vmatpush1.msra.mxu0 0.0
    %286 = vmatprep.subr.mxu0 0.0
    %287 = vmatpush1.msra.mxu0 0.0
    %288 = vmatprep.subr.mxu0 0.0
    %289 = vmatpush1.msra.mxu0 0.0
    %290 = vmatprep.subr.mxu0 0.0
    %291 = vmatpush1.msra.mxu0 0.0
    %292 = vmatprep.subr.mxu0 0.0
    %293 = vmatpush1.msra.mxu0 0.0
    %294 = vmatprep.subr.mxu0 0.0
    %295 = vmatpush1.msra.mxu0 0.0
    %296 = vmatprep.subr.mxu0 0.0
    %297 = vmatpush1.msra.mxu0 0.0
    %298 = vmatprep.subr.mxu0 0.0
    %299 = vmatpush1.msra.mxu0 0.0
    %300 = vmatprep.subr.mxu0 0.0
    %301 = vmatpush1.msra.mxu0 0.0
    %302 = vmatprep.subr.mxu0 0.0
    %303 = vmatpush1.msra.mxu0 0.0
    %304 = vmatprep.subr.mxu0 0.0
    %305 = vmatpush1.msra.mxu0 0.0
    %306 = vmatprep.subr.mxu0 0.0
    %307 = vmatpush1.msra.mxu0 0.0
    %308 = vmatprep.subr.mxu0 0.0
    %309 = vmatpush1.msra.mxu0 0.0
    %310 = vmatprep.subr.mxu0 0.0
    %311 = vmatpush1.msra.mxu0 0.0
    %312 = vmatprep.subr.mxu0 0.0
    %313 = vmatpush1.msra.mxu0 0.0
    %314 = vmatprep.subr.mxu0 0.0
    %315 = vmatpush1.msra.mxu0 0.0
    %316 = vmatprep.subr.mxu0 0.0
    %317 = vmatpush1.msra.mxu0 0.0
    %318 = vmatprep.subr.mxu0 0.0
    %319 = vmatpush1.msra.mxu0 0.0
    %320 = vmatprep.mubr.f32.mxu0 0.0
    %321 = vmatmul.mubr.f32.gmra.mrb[0].mxu0 %v251
    %v322 = vpop.f32.mrb[0].mxu0
    %v323 = vadd.f32 0.0, %v322
    %v324 = vpop.f32.mrb[0].mxu0
    %325 = vmatprep.mubr.f32.mxu0 0.0
    %326 = vmatmul.mubr.f32.gmra.mrb[0].mxu0 %v254
    %v327 = vpop.f32.mrb[0].mxu0
    %v328 = vadd.f32 0.0, %v327
    %v329 = vpop.f32.mrb[0].mxu0
    %330 = vdwg.mxu0
    %v331 = vadd.f32 %v239, %v323
    %v332 = vadd.f32 %v240, %v328
    %333 = vst.msk [vmem:[#allocation2] sm:$0xff] %vm55, %v331
    %334 = vst.msk [vmem:[#allocation2 + $0x8] sm:$0xff] %vm55, %v332
    // Predicated region
    $region34: #{mlp_pallas.1} parent=1 // pred_check
      %p335 = pneg %p27
    $region35: #{mlp_pallas.1} parent=1 // pred_check_branch
      %337 = sbr.rel (%p335) target = $region37
    $region36: #{mlp_pallas.1} parent=1 // pred_region
      %v338 = vld [vmem:[#allocation2] sm:$0xff]
      %v339 = vld [vmem:[#allocation2 + $0x8] sm:$0xff]
      %340 = vst.msk [vmem:[#allocation3] sm:$0xff] %vm55, %v338
      %341 = vst.msk [vmem:[#allocation3 + $0x8] sm:$0xff] %vm55, %v339
    $region37: #{mlp_pallas.1} parent=1 // pred_fallthru
      _
    // Predicated region
    $region38: #{mlp_pallas.1} parent=1 // pred_check
      _
    $region39: #{mlp_pallas.1} parent=1 // pred_check_branch
      %343 = sbr.rel (0) target = $region41
    $region40: #{mlp_pallas.1} parent=1 // pred_region
      %s345 = ssub.s32 256, 256
      %346 = vsyncadd [#allocation4], %s345
      %s347 = sshll.u32 [#allocation3], 4
      %s348 = int_to_ptr.vmem [resolvable:$true] %s347
      %353 = dma.vmem_to_hbm [thread:$0]  %s348, 256, %s7, [#allocation4], 128, 128, 8
    $region41: #{mlp_pallas.1} parent=1 // pred_fallthru
      _
    // Predicated region
    $region42: #{mlp_pallas.1} parent=1 // pred_check
      _
    $region43: #{mlp_pallas.1} parent=1 // pred_check_branch
      %355 = sbr.rel (0) target = $region45
    $region44: #{mlp_pallas.1} parent=1 // pred_region
      %356 = dma.done [#allocation4], 256
    $region45: #{mlp_pallas.1} parent=1 // pred_fallthru
      _
    %357 = vsyncpa [#allocation4], 1

</llo_original>
